<compile_context>
chip_gen: v7x
topology: tpu7x:2x2x1
jax: 0.10.0
libtpu: 0.0.40
codegen_flags: <defaults>
</compile_context>

<pallas_src>
import functools
import jax
import jax.numpy as jnp
from jax.experimental import pallas as pl
from jax.experimental.pallas import tpu as pltpu


def _categorical_kernel(*refs, deterministic):
    if deterministic:
        x_ref, w_ref, b_ref, pred_ref, logp_ref, ent_ref = refs
        g = None
    else:
        x_ref, w_ref, b_ref, g_ref, pred_ref, logp_ref, ent_ref = refs
        g = g_ref[...]                                    # (N, TB) f32

    x = x_ref[...]                                        # (TB, D) bf16
    w = w_ref[...]                                        # (N, D)  bf16 (PyTorch layout)
    b = b_ref[...]                                        # (N, 1)  f32

    # logits^T = W @ x^T  -> (N, TB), f32 accumulation on the MXU
    logits = jax.lax.dot_general(
        w, x,
        dimension_numbers=(((1,), (1,)), ((), ())),
        preferred_element_type=jnp.float32) + b           # (N, TB)
    N, TB = logits.shape

    # Numerically-stable softmax pieces (reductions over the sublane axis ->
    # lane-dense (1, TB) rows).  No probs / log_probs materialization.
    m = jnp.max(logits, axis=0, keepdims=True)            # (1, TB)
    z = logits - m                                        # (N, TB)
    ez = jnp.exp(z)                                       # (N, TB)
    se = jnp.sum(ez, axis=0, keepdims=True)               # (1, TB)
    log_se = jnp.log(se)                                  # (1, TB)
    inv_se = 1.0 / se                                     # (1, TB)

    # Per-row entropy:  H = log(se) - sum(ez * z) / se
    ent_row = log_se - jnp.sum(ez * z, axis=0, keepdims=True) * inv_se

    # Argmax (deterministic) or Gumbel-max sample (stochastic), first-max ties.
    scores = logits if g is None else logits + g
    ii = jax.lax.broadcasted_iota(jnp.int32, (N, TB), 0)
    smax = jnp.max(scores, axis=0, keepdims=True)
    idx = jnp.min(jnp.where(scores == smax, ii, N), axis=0, keepdims=True)  # (1, TB)

    if g is None:
        # At the argmax row z == 0, so log_prob = -log(se); no gather needed.
        logp_row = -log_se
    else:
        logp_row = jnp.sum(jnp.where(ii == idx, z, 0.0),
                           axis=0, keepdims=True) - log_se

    pred_ref[...] = idx.astype(jnp.int32)
    logp_ref[...] = logp_row
    ent_ref[...] = ent_row


def categorical_forward(x, weight, bias, key=None, deterministic=False):
    """Forward pass of the Categorical head.

    x      : (B, num_inputs) features
    weight : (num_outputs, num_inputs) PyTorch-layout Linear weight
    bias   : (num_outputs,)
    """
    B, D = x.shape
    N = weight.shape[0]

    # Batch tiling: single full-size tile for small batches, 256-row tiles
    # (8/128 aligned) otherwise.
    TILE_B = B if B <= 256 else 256
    B_pad = ((B + TILE_B - 1) // TILE_B) * TILE_B
    num_tiles = B_pad // TILE_B

    xb = x.astype(jnp.bfloat16)                           # bf16 MXU operand
    if B_pad != B:
        xb = jnp.pad(xb, ((0, B_pad - B), (0, 0)))
    wb = weight.astype(jnp.bfloat16)                      # keep (N, D) layout
    b2 = bias.reshape(N, 1).astype(jnp.float32)

    inputs = [xb, wb, b2]
    in_specs = [
        pl.BlockSpec((TILE_B, D), lambda i: (i, 0)),
        pl.BlockSpec((N, D), lambda i: (0, 0)),
        pl.BlockSpec((N, 1), lambda i: (0, 0)),
    ]
    if not deterministic:
        if key is None:
            key = jax.random.PRNGKey(0)
        gumbel = jax.random.gumbel(key, (N, B_pad), dtype=jnp.float32)
        inputs.append(gumbel)
        in_specs.append(pl.BlockSpec((N, TILE_B), lambda i: (0, i)))

    out_shapes = (
        jax.ShapeDtypeStruct((1, B_pad), jnp.int32),     # pred (lane-dense row)
        jax.ShapeDtypeStruct((1, B_pad), jnp.float32),   # logp
        jax.ShapeDtypeStruct((1, B_pad), jnp.float32),   # per-row entropy
    )
    out_specs = (
        pl.BlockSpec((1, TILE_B), lambda i: (0, i)),
        pl.BlockSpec((1, TILE_B), lambda i: (0, i)),
        pl.BlockSpec((1, TILE_B), lambda i: (0, i)),
    )

    kernel = functools.partial(_categorical_kernel, deterministic=deterministic)

    pred_row, logp_row, ent_row = pl.pallas_call(
        kernel,
        out_shape=out_shapes,
        grid=(num_tiles,),
        in_specs=in_specs,
        out_specs=out_specs,
        compiler_params=pltpu.CompilerParams(
            dimension_semantics=("parallel",),
            vmem_limit_bytes=32 * 1024 * 1024,
        ),
    )(*inputs)

    pred = pred_row[0, :B].reshape(B, 1)
    clipped_pred = pred                       # Categorical never clips; alias here
    logp = logp_row[0, :B].reshape(B, 1)
    entropy = jnp.mean(ent_row[0, :B])        # batch-mean entropy in the wrapper
    # TODO(synk): the torch.distributions.Categorical "dist" return value has no
    # Pallas equivalent; sample / logp / entropy are returned directly instead.
    return pred, clipped_pred, logp, entropy


if __name__ == "__main__":
    num_inputs, num_outputs, batch = 32, 16, 8

    key = jax.random.PRNGKey(0)
    kx, kw, ks = jax.random.split(key, 3)

    # Orthogonal init with gain sqrt(0.01) = 0.1, zero bias (matches the module)
    weight = jax.nn.initializers.orthogonal(scale=0.1)(
        kw, (num_outputs, num_inputs), jnp.float32)       # PyTorch layout (out, in)
    bias = jnp.zeros((num_outputs,), jnp.float32)

    x = jax.random.normal(kx, (batch, num_inputs), dtype=jnp.float32)

    # stochastic path (forward's default)
    outs = categorical_forward(x, weight, bias, key=ks, deterministic=False)
    jax.block_until_ready(outs)

    # deterministic path (argmax)
    outs_det = categorical_forward(x, weight, bias, deterministic=True)
    jax.block_until_ready(outs_det)

    print("KERNEL_OK")
</pallas_src>

<mosaic_0001>
module attributes {stable_mosaic.version = 11 : i64} {
  func.func @_categorical_kernel(%arg0: i32, %arg1: memref<8x32xbf16, #tpu.memory_space<vmem>>, %arg2: memref<16x32xbf16, #tpu.memory_space<vmem>>, %arg3: memref<16x1xf32, #tpu.memory_space<vmem>>, %arg4: memref<16x8xf32, #tpu.memory_space<vmem>>, %arg5: memref<1x8xi32, #tpu.memory_space<vmem>>, %arg6: memref<1x8xf32, #tpu.memory_space<vmem>>, %arg7: memref<1x8xf32, #tpu.memory_space<vmem>>) attributes {dimension_semantics = [#tpu.dimension_semantics<parallel>], iteration_bounds = array<i64: 1>, scalar_prefetch = 0 : i64, scratch_operands = 0 : i64, tpu.core_type = #tpu.core_type<tc>, window_params = [{transform_indices = @transform_0, window_bounds = array<i64: 8, 32>}, {pipeline_mode = #tpu.pipeline_mode<synchronous>, transform_indices = @transform_1, window_bounds = array<i64: 16, 32>}, {pipeline_mode = #tpu.pipeline_mode<synchronous>, transform_indices = @transform_2, window_bounds = array<i64: 16, 1>}, {transform_indices = @transform_3, window_bounds = array<i64: 16, 8>}, {transform_indices = @transform_4, window_bounds = array<i64: 1, 8>}, {transform_indices = @transform_5, window_bounds = array<i64: 1, 8>}, {transform_indices = @transform_6, window_bounds = array<i64: 1, 8>}]} {
    %c0 = arith.constant 0 : index
    %c0_0 = arith.constant 0 : index
    %0 = vector.load %arg4[%c0, %c0_0] : memref<16x8xf32, #tpu.memory_space<vmem>>, vector<16x8xf32>
    %c0_1 = arith.constant 0 : index
    %c0_2 = arith.constant 0 : index
    %1 = vector.load %arg1[%c0_1, %c0_2] : memref<8x32xbf16, #tpu.memory_space<vmem>>, vector<8x32xbf16>
    %c0_3 = arith.constant 0 : index
    %c0_4 = arith.constant 0 : index
    %2 = vector.load %arg2[%c0_3, %c0_4] : memref<16x32xbf16, #tpu.memory_space<vmem>>, vector<16x32xbf16>
    %c0_5 = arith.constant 0 : index
    %c0_6 = arith.constant 0 : index
    %3 = vector.load %arg3[%c0_5, %c0_6] : memref<16x1xf32, #tpu.memory_space<vmem>>, vector<16x1xf32>
    %cst = arith.constant dense<0.000000e+00> : vector<16x8xf32>
    %4 = tpu.matmul %2, %1, %cst {dimension_numbers = #tpu.dot_dimension_numbers<[1], [1], [0], [0], [0, 0, 1, 0], [], []>} : vector<16x32xbf16>, vector<8x32xbf16>, vector<16x8xf32> -> vector<16x8xf32>
    %5 = vector.broadcast %3 : vector<16x1xf32> to vector<16x8xf32>
    %6 = arith.addf %4, %5 : vector<16x8xf32>
    %cst_7 = arith.constant dense<0xFF800000> : vector<8xf32>
    %7 = vector.multi_reduction <maximumf>, %6, %cst_7 [0] : vector<16x8xf32> to vector<8xf32>
    %8 = vector.shape_cast %7 : vector<8xf32> to vector<1x8xf32>
    %9 = vector.broadcast %8 : vector<1x8xf32> to vector<16x8xf32>
    %10 = arith.subf %6, %9 : vector<16x8xf32>
    %11 = math.exp %10 : vector<16x8xf32>
    %cst_8 = arith.constant dense<0.000000e+00> : vector<8xf32>
    %12 = vector.multi_reduction <add>, %11, %cst_8 [0] : vector<16x8xf32> to vector<8xf32>
    %13 = vector.shape_cast %12 : vector<8xf32> to vector<1x8xf32>
    %14 = math.log %13 : vector<1x8xf32>
    %cst_9 = arith.constant 1.000000e+00 : f32
    %15 = vector.broadcast %cst_9 : f32 to vector<1x8xf32>
    %16 = arith.divf %15, %13 : vector<1x8xf32>
    %17 = arith.mulf %11, %10 : vector<16x8xf32>
    %cst_10 = arith.constant dense<0.000000e+00> : vector<8xf32>
    %18 = vector.multi_reduction <add>, %17, %cst_10 [0] : vector<16x8xf32> to vector<8xf32>
    %19 = vector.shape_cast %18 : vector<8xf32> to vector<1x8xf32>
    %20 = arith.mulf %19, %16 : vector<1x8xf32>
    %21 = arith.subf %14, %20 : vector<1x8xf32>
    %22 = arith.addf %6, %0 : vector<16x8xf32>
    %23 = tpu.iota {dimensions = array<i32: 0>} : vector<16x8xi32>
    %cst_11 = arith.constant dense<0xFF800000> : vector<8xf32>
    %24 = vector.multi_reduction <maximumf>, %22, %cst_11 [0] : vector<16x8xf32> to vector<8xf32>
    %25 = vector.shape_cast %24 : vector<8xf32> to vector<1x8xf32>
    %26 = vector.broadcast %25 : vector<1x8xf32> to vector<16x8xf32>
    %27 = arith.cmpf oeq, %22, %26 : vector<16x8xf32>
    %c16_i32 = arith.constant 16 : i32
    %28 = vector.broadcast %c16_i32 : i32 to vector<16x8xi32>
    %29 = arith.select %27, %23, %28 : vector<16x8xi1>, vector<16x8xi32>
    %cst_12 = arith.constant dense<2147483647> : vector<8xi32>
    %30 = vector.multi_reduction <minsi>, %29, %cst_12 [0] : vector<16x8xi32> to vector<8xi32>
    %31 = vector.shape_cast %30 : vector<8xi32> to vector<1x8xi32>
    %32 = vector.broadcast %31 : vector<1x8xi32> to vector<16x8xi32>
    %33 = arith.cmpi eq, %23, %32 : vector<16x8xi32>
    %cst_13 = arith.constant 0.000000e+00 : f32
    %34 = vector.broadcast %cst_13 : f32 to vector<16x8xf32>
    %35 = arith.select %33, %10, %34 : vector<16x8xi1>, vector<16x8xf32>
    %cst_14 = arith.constant dense<0.000000e+00> : vector<8xf32>
    %36 = vector.multi_reduction <add>, %35, %cst_14 [0] : vector<16x8xf32> to vector<8xf32>
    %37 = vector.shape_cast %36 : vector<8xf32> to vector<1x8xf32>
    %38 = arith.subf %37, %14 : vector<1x8xf32>
    %c0_15 = arith.constant 0 : index
    %c0_16 = arith.constant 0 : index
    %39 = vector.load %arg5[%c0_15, %c0_16] : memref<1x8xi32, #tpu.memory_space<vmem>>, vector<1x8xi32>
    tpu.vector_store %arg5[%c0_15, %c0_16], %31 {strides = array<i32>} : memref<1x8xi32, #tpu.memory_space<vmem>>, vector<1x8xi32>,
    %c0_17 = arith.constant 0 : index
    %c0_18 = arith.constant 0 : index
    %40 = vector.load %arg6[%c0_17, %c0_18] : memref<1x8xf32, #tpu.memory_space<vmem>>, vector<1x8xf32>
    tpu.vector_store %arg6[%c0_17, %c0_18], %38 {strides = array<i32>} : memref<1x8xf32, #tpu.memory_space<vmem>>, vector<1x8xf32>,
    %c0_19 = arith.constant 0 : index
    %c0_20 = arith.constant 0 : index
    %41 = vector.load %arg7[%c0_19, %c0_20] : memref<1x8xf32, #tpu.memory_space<vmem>>, vector<1x8xf32>
    tpu.vector_store %arg7[%c0_19, %c0_20], %21 {strides = array<i32>} : memref<1x8xf32, #tpu.memory_space<vmem>>, vector<1x8xf32>,
    return
  }
  func.func @transform_0(%arg0: i32) -> (i32, i32) {
    %c0_i32 = arith.constant 0 : i32
    %c0_i32_0 = arith.constant 0 : i32
    return %arg0, %c0_i32 : i32, i32
  }
  func.func @transform_1(%arg0: i32) -> (i32, i32) {
    %c0_i32 = arith.constant 0 : i32
    %c0_i32_0 = arith.constant 0 : i32
    %c0_i32_1 = arith.constant 0 : i32
    return %c0_i32, %c0_i32_0 : i32, i32
  }
  func.func @transform_2(%arg0: i32) -> (i32, i32) {
    %c0_i32 = arith.constant 0 : i32
    %c0_i32_0 = arith.constant 0 : i32
    %c0_i32_1 = arith.constant 0 : i32
    return %c0_i32, %c0_i32_0 : i32, i32
  }
  func.func @transform_3(%arg0: i32) -> (i32, i32) {
    %c0_i32 = arith.constant 0 : i32
    %c0_i32_0 = arith.constant 0 : i32
    return %c0_i32, %arg0 : i32, i32
  }
  func.func @transform_4(%arg0: i32) -> (i32, i32) {
    %c0_i32 = arith.constant 0 : i32
    %c0_i32_0 = arith.constant 0 : i32
    return %c0_i32, %arg0 : i32, i32
  }
  func.func @transform_5(%arg0: i32) -> (i32, i32) {
    %c0_i32 = arith.constant 0 : i32
    %c0_i32_0 = arith.constant 0 : i32
    return %c0_i32, %arg0 : i32, i32
  }
  func.func @transform_6(%arg0: i32) -> (i32, i32) {
    %c0_i32 = arith.constant 0 : i32
    %c0_i32_0 = arith.constant 0 : i32
    return %c0_i32, %arg0 : i32, i32
  }
}

</mosaic_0001>

<llo_original>
// kernel: tpu_custom_call.1
$region0: #{tpu_custom_call.1}
  #allocation0 [shape = 'u32[]', space=smem, size = 0x4, offset = 0x4, fixed_abs, tag = 'smem constant byte address 0x4 - core index']
  #allocation1 [shape = 'u32[144,128]{1,0:T(1,128)}', space=vmem, size = 0x12000, scoped, tag = 'internal scratch']
  %s0 = inlined_call_operand.vmem [shape: bf16[8,32], index: 0, kind: input, shape index: {}]
  %s1 = inlined_call_operand.vmem [shape: bf16[16,32], index: 1, kind: input, shape index: {}]
  %s2 = inlined_call_operand.vmem [shape: f32[16,1], index: 2, kind: input, shape index: {}]
  %s3 = inlined_call_operand.vmem [shape: f32[16,8], index: 3, kind: input, shape index: {}]
  %s4 = inlined_call_operand.hbm [shape: s32[1,8], index: 4, kind: output, shape index: {0}]
  %s5 = inlined_call_operand.hbm [shape: f32[1,8], index: 5, kind: output, shape index: {1}]
  %s6 = inlined_call_operand.hbm [shape: f32[1,8], index: 6, kind: output, shape index: {2}]
  %7 = xla_tuple %s4, %s5, %s6
  %s8 = sld [smem:[#allocation0]]
  $region42: #{tpu_custom_call.1} parent=0
    _
  %s10 = ssub.s32 1, %s8
  %s11 = scalar_select 0, %s10, %s8
  $region1: #{tpu_custom_call.1} parent=0
    #allocation2 [shape = 'u8[512]{0}', space=vmem, size = 0x400, scoped, tag = 'output window, operand 0, single buffered']
    #allocation3 [shape = 's32[1]{0}', space=sflag, size = 0x4, scoped, tag = 'scoped memory for tpu_custom_call.1']
    #allocation4 [shape = 'u8[512]{0}', space=vmem, size = 0x400, scoped, tag = 'output window, operand 1, single buffered']
    #allocation5 [shape = 's32[1]{0}', space=sflag, size = 0x4, scoped, tag = 'scoped memory for tpu_custom_call.1']
    #allocation6 [shape = 'u8[512]{0}', space=vmem, size = 0x400, scoped, tag = 'output window, operand 2, single buffered']
    %12 = vsyncpa [#allocation3], 0
    %13 = vsyncpa [#allocation5], 0
    // Predicated region
    $region2: #{tpu_custom_call.1} parent=1 // pred_check
      _
    $region3: #{tpu_custom_call.1} parent=1 // pred_check_branch
      %15 = sbr.rel (0) target = $region5
    $region4: #{tpu_custom_call.1} parent=1 // pred_region
      _
    $region5: #{tpu_custom_call.1} parent=1 // pred_fallthru
      _
    // Predicated region
    $region6: #{tpu_custom_call.1} parent=1 // pred_check
      _
    $region7: #{tpu_custom_call.1} parent=1 // pred_check_branch
      %17 = sbr.rel (0) target = $region9
    $region8: #{tpu_custom_call.1} parent=1 // pred_region
      _
    $region9: #{tpu_custom_call.1} parent=1 // pred_fallthru
      _
    // Predicated region
    $region10: #{tpu_custom_call.1} parent=1 // pred_check
      _
    $region11: #{tpu_custom_call.1} parent=1 // pred_check_branch
      %19 = sbr.rel (0) target = $region13
    $region12: #{tpu_custom_call.1} parent=1 // pred_region
      _
    $region13: #{tpu_custom_call.1} parent=1 // pred_fallthru
      _
    // Predicated region
    $region14: #{tpu_custom_call.1} parent=1 // pred_check
      _
    $region15: #{tpu_custom_call.1} parent=1 // pred_check_branch
      %21 = sbr.rel (0) target = $region17
    $region16: #{tpu_custom_call.1} parent=1 // pred_region
      _
    $region17: #{tpu_custom_call.1} parent=1 // pred_fallthru
      _
    %v23 = vld [vmem:[%s3] sm:$0xff]
    %v24 = vld [vmem:[%s3 + $0x8] sm:$0xff]
    %v25 = vld [vmem:[%s0] sm:$0xf]
    %v26 = vld [vmem:[%s1] sm:$0xf]
    %v27 = vld [vmem:[%s1 + $0x4] sm:$0xf]
    %v28 = vld [vmem:[%s2] sm:$0xff]
    %v29 = vld [vmem:[%s2 + $0x8] sm:$0xff]
    %31 = vset.pattern.permute.xlu0 0
    %32 = vperm.xlu0 %31, %v28
    %v33 = vpop.permute.xlu0 %32
    %36 = vset.pattern.permute.xlu0 0
    %37 = vperm.xlu0 %36, %v29
    %v38 = vpop.permute.xlu0 %37
    %v42 = vunpack.c.l.b16 %v26
    %v43 = vunpack.c.l.b16 %v27
    %v44 = vpack.c.b16 %v43, %v42
    %vm45 = vcmask 261120
    %v47 = vsel %vm45, %v44, 0
    %v50 = vsel %vm45, %v25, 0
    %52 = vmatprep.subr.bf16.mxu0 0
    %53 = vmatpush1.bf16.xpose.msra.mxu0 %v50
    %54 = vmatprep.subr.bf16.mxu0 0
    %55 = vmatpush1.bf16.xpose.msra.mxu0 0
    %56 = vmatprep.subr.bf16.mxu0 0
    %57 = vmatpush1.bf16.xpose.msra.mxu0 0
    %58 = vmatprep.subr.bf16.mxu0 0
    %59 = vmatpush1.bf16.xpose.msra.mxu0 0
    %60 = vmatprep.subr.bf16.mxu0 0
    %61 = vmatpush1.bf16.xpose.msra.mxu0 0
    %62 = vmatprep.subr.bf16.mxu0 0
    %63 = vmatpush1.bf16.xpose.msra.mxu0 0
    %64 = vmatprep.subr.bf16.mxu0 0
    %65 = vmatpush1.bf16.xpose.msra.mxu0 0
    %66 = vmatprep.subr.bf16.mxu0 0
    %67 = vmatpush1.bf16.xpose.msra.mxu0 0
    %68 = vmatprep.subr.bf16.mxu0 0
    %69 = vmatpush1.bf16.xpose.msra.mxu0 0
    %70 = vmatprep.subr.bf16.mxu0 0
    %71 = vmatpush1.bf16.xpose.msra.mxu0 0
    %72 = vmatprep.subr.bf16.mxu0 0
    %73 = vmatpush1.bf16.xpose.msra.mxu0 0
    %74 = vmatprep.subr.bf16.mxu0 0
    %75 = vmatpush1.bf16.xpose.msra.mxu0 0
    %76 = vmatprep.subr.bf16.mxu0 0
    %77 = vmatpush1.bf16.xpose.msra.mxu0 0
    %78 = vmatprep.subr.bf16.mxu0 0
    %79 = vmatpush1.bf16.xpose.msra.mxu0 0
    %80 = vmatprep.subr.bf16.mxu0 0
    %81 = vmatpush1.bf16.xpose.msra.mxu0 0
    %82 = vmatprep.subr.bf16.mxu0 0
    %83 = vmatpush1.bf16.xpose.msra.mxu0 0
    %84 = vmatprep.mubr.bf16.mxu0 0
    %85 = vmatmul.mubr.bf16.gmra.mrb[0].mxu0 %v47
    %v86 = vpop.f32.mrb[0].mxu0
    %v87 = vadd.f32 %v33, %v86
    %v88 = vpop.f32.mrb[0].mxu0
    %v89 = vpop.f32.mrb[0].mxu0
    %v90 = vadd.f32 %v38, %v89
    %v91 = vpop.f32.mrb[0].mxu0
    %92 = vdwg.mxu0
    %vm93 = vcmask 64512
    %v94 = vsel %vm93, %v87, -inf
    %v95 = vsel %vm93, %v90, -inf
    %v96 = vmax.f32 %v94, %v95
    %v97 = vrot.slane %v96, 4
    %v98 = vmax.f32 %v96, %v97
    %v99 = vrot.slane %v98, 2
    %v100 = vmax.f32 %v98, %v99
    %v101 = vrot.slane %v100, 1
    %v102 = vmax.f32 %v100, %v101
    %v103 = vsub.f32 %v87, %v102
    %v104 = vsub.f32 %v90, %v102
    %v105 = vmul.f32 %v103, 1.442695
    %v106 = vpow.pop %v105
    %v107 = vmul.f32 %v104, 1.442695
    %v108 = vpow.pop %v107
    %v109 = vsel %vm93, %v106, 0.0
    %v110 = vsel %vm93, %v108, 0.0
    %v111 = vadd.f32 %v109, %v110
    %v112 = vrot.slane %v111, 4
    %v113 = vadd.f32 %v111, %v112
    %v114 = vrot.slane %v113, 2
    %v115 = vadd.f32 %v113, %v114
    %v116 = vrot.slane %v115, 1
    %v117 = vadd.f32 %v115, %v116
    %v118 = vlog2.pop %v117
    %v119 = vmul.f32 %v118, 0.6931472
    %v120 = vrcp.pop %v117
    %v121 = vmul.f32 1.0, %v120
    %v122 = vmul.f32 %v106, %v103
    %v123 = vmul.f32 %v108, %v104
    %v124 = vsel %vm93, %v122, 0.0
    %v125 = vsel %vm93, %v123, 0.0
    %v126 = vadd.f32 %v124, %v125
    %v127 = vrot.slane %v126, 4
    %v128 = vadd.f32 %v126, %v127
    %v129 = vrot.slane %v128, 2
    %v130 = vadd.f32 %v128, %v129
    %v131 = vrot.slane %v130, 1
    %v132 = vadd.f32 %v130, %v131
    %v133 = vmul.f32 %v132, %v121
    %v134 = vsub.f32 %v119, %v133
    %v135 = vadd.f32 %v87, %v23
    %v136 = vadd.f32 %v90, %v24
    %v137 = vlaneseq
    %v138 = vshrl.u32 %v137, 7
    %v139 = vadd.s32 %v138, 8
    %v140 = vsel %vm93, %v135, -inf
    %v141 = vsel %vm93, %v136, -inf
    %v142 = vmax.f32 %v140, %v141
    %v143 = vrot.slane %v142, 4
    %v144 = vmax.f32 %v142, %v143
    %v145 = vrot.slane %v144, 2
    %v146 = vmax.f32 %v144, %v145
    %v147 = vrot.slane %v146, 1
    %v148 = vmax.f32 %v146, %v147
    %vm149 = vcmp.eq.f32.partialorder %v135, %v148
    %vm150 = vcmp.eq.f32.partialorder %v136, %v148
    %v151 = vsel %vm149, %v138, 16
    %v152 = vsel %vm150, %v139, 16
    %v153 = vsel %vm93, %v151, 2147483647
    %v154 = vsel %vm93, %v152, 2147483647
    %vm155 = vcmp.lt.s32.totalorder %v153, %v154
    %v156 = vsel %vm155, %v153, %v154
    %v157 = vrot.slane %v156, 4
    %vm158 = vcmp.lt.s32.totalorder %v156, %v157
    %v159 = vsel %vm158, %v156, %v157
    %v160 = vrot.slane %v159, 2
    %vm161 = vcmp.lt.s32.totalorder %v159, %v160
    %v162 = vsel %vm161, %v159, %v160
    %v163 = vrot.slane %v162, 1
    %vm164 = vcmp.lt.s32.totalorder %v162, %v163
    %v165 = vsel %vm164, %v162, %v163
    %vm166 = vcmp.eq.s32.totalorder %v138, %v165
    %vm167 = vcmp.eq.s32.totalorder %v139, %v165
    %v168 = vsel %vm166, %v103, 0.0
    %v169 = vsel %vm167, %v104, 0.0
    %v170 = vsel %vm93, %v168, 0.0
    %v171 = vsel %vm93, %v169, 0.0
    %v172 = vadd.f32 %v170, %v171
    %v173 = vrot.slane %v172, 4
    %v174 = vadd.f32 %v172, %v173
    %v175 = vrot.slane %v174, 2
    %v176 = vadd.f32 %v174, %v175
    %v177 = vrot.slane %v176, 1
    %v178 = vadd.f32 %v176, %v177
    %v179 = vsub.f32 %v178, %v119
    %vm180 = vcmask 57344
    %181 = vst.msk [vmem:[#allocation2] sm:$0x1] %vm180, %v165
    %182 = vst.msk [vmem:[#allocation4] sm:$0x1] %vm180, %v179
    %183 = vst.msk [vmem:[#allocation6] sm:$0x1] %vm180, %v134
    // Predicated region
    $region18: #{tpu_custom_call.1} parent=1 // pred_check
      _
    $region19: #{tpu_custom_call.1} parent=1 // pred_check_branch
      %185 = sbr.rel (0) target = $region21
    $region20: #{tpu_custom_call.1} parent=1 // pred_region
      %s187 = ssub.s32 16, 16
      %188 = vsyncadd [#allocation3], %s187
      %s190 = sshll.u32 [#allocation2], 4
      %s191 = int_to_ptr.vmem [resolvable:$true] %s190
      %193 = dma.vmem_to_hbm [thread:$0]  %s191, 16, %s4, [#allocation3]
    $region21: #{tpu_custom_call.1} parent=1 // pred_fallthru
      _
    // Predicated region
    $region22: #{tpu_custom_call.1} parent=1 // pred_check
      _
    $region23: #{tpu_custom_call.1} parent=1 // pred_check_branch
      %195 = sbr.rel (0) target = $region25
    $region24: #{tpu_custom_call.1} parent=1 // pred_region
      %s197 = ssub.s32 16, 16
      %198 = vsyncadd [#allocation5], %s197
      %s200 = sshll.u32 [#allocation4], 4
      %s201 = int_to_ptr.vmem [resolvable:$true] %s200
      %203 = dma.vmem_to_hbm [thread:$0]  %s201, 16, %s5, [#allocation5]
    $region25: #{tpu_custom_call.1} parent=1 // pred_fallthru
      _
    // Predicated region
    $region26: #{tpu_custom_call.1} parent=1 // pred_check
      _
    $region27: #{tpu_custom_call.1} parent=1 // pred_check_branch
      %205 = sbr.rel (0) target = $region29
    $region28: #{tpu_custom_call.1} parent=1 // pred_region
      %s207 = ssub.s32 16, 16
      %208 = vsyncadd [#allocation5], %s207
      %s210 = sshll.u32 [#allocation6], 4
      %s211 = int_to_ptr.vmem [resolvable:$true] %s210
      %213 = dma.vmem_to_hbm [thread:$0]  %s211, 16, %s6, [#allocation5]
    $region29: #{tpu_custom_call.1} parent=1 // pred_fallthru
      _
    // Predicated region
    $region30: #{tpu_custom_call.1} parent=1 // pred_check
      _
    $region31: #{tpu_custom_call.1} parent=1 // pred_check_branch
      %215 = sbr.rel (0) target = $region33
    $region32: #{tpu_custom_call.1} parent=1 // pred_region
      %216 = dma.done [#allocation3], 16
    $region33: #{tpu_custom_call.1} parent=1 // pred_fallthru
      _
    // Predicated region
    $region34: #{tpu_custom_call.1} parent=1 // pred_check
      _
    $region35: #{tpu_custom_call.1} parent=1 // pred_check_branch
      %218 = sbr.rel (0) target = $region37
    $region36: #{tpu_custom_call.1} parent=1 // pred_region
      %219 = dma.done [#allocation5], 16
    $region37: #{tpu_custom_call.1} parent=1 // pred_fallthru
      _
    // Predicated region
    $region38: #{tpu_custom_call.1} parent=1 // pred_check
      _
    $region39: #{tpu_custom_call.1} parent=1 // pred_check_branch
      %221 = sbr.rel (0) target = $region41
    $region40: #{tpu_custom_call.1} parent=1 // pred_region
      %222 = dma.done [#allocation5], 16
    $region41: #{tpu_custom_call.1} parent=1 // pred_fallthru
      _
    %223 = vsyncpa [#allocation3], 1
    %224 = vsyncpa [#allocation5], 1

</llo_original>
